<compile_context>
chip_gen: v7x
topology: tpu7x:2x2x1
jax: 0.10.0
libtpu: 0.0.40
codegen_flags: <defaults>
</compile_context>

<pallas_src>
import functools
from typing import NamedTuple

import jax
import jax.numpy as jnp
from jax.experimental import pallas as pl
from jax.experimental.pallas import tpu as pltpu

LANE = 128


def _round_up(x, m):
    return (x + m - 1) // m * m


def _pad2(a, rows, cols):
    r, c = a.shape
    return jnp.pad(a, ((0, rows - r), (0, cols - c)))


# ----------------------------------------------------------------------------
# Generation-aware sizing
# ----------------------------------------------------------------------------
class _DeviceConfig(NamedTuple):
    resident_a_budget: int   # keep A_hat fully VMEM-resident below this byte size
    resident_vmem_cap: int   # scoped-VMEM ceiling for the resident path
    tiled_vmem_limit: int    # scoped-VMEM limit for the tiled path
    multi_tc: bool           # >1 TensorCore per chip (v7x) -> prefer the parallel grid


def _device_config():
    try:
        vmem_cap = int(pltpu.get_tpu_info().vmem_capacity_bytes)
    except Exception:
        vmem_cap = 64 << 20  # conservative default (v7x-class)
    if vmem_cap <= (64 << 20):
        # v7x-class: 64 MiB VMEM, 2 TensorCores/chip, 3.2 TB/s HBM.  The resident path
        # is a single grid point (uses one TC), so go tiled early; stay well under VMEM.
        return _DeviceConfig(resident_a_budget=4 << 20,
                             resident_vmem_cap=40 << 20,
                             tiled_vmem_limit=40 << 20,
                             multi_tc=True)
    # v5e / v6e: 128 MiB VMEM, single TensorCore, weaker HBM.  The resident path reads A
    # exactly once (the tiled path streams it twice), so keep mid-size graphs resident.
    return _DeviceConfig(resident_a_budget=72 << 20,
                         resident_vmem_cap=100 << 20,
                         tiled_vmem_limit=64 << 20,
                         multi_tc=False)


# ----------------------------------------------------------------------------
# Adjacency normalization (plain-JAX glue; cacheable per graph, GCNConv(cached=True))
# ----------------------------------------------------------------------------
def build_normalized_adjacency(edge_index, num_nodes, *, pad_to=None, dtype=jnp.bfloat16):
    """Dense A_hat = D^-1/2 (A + I) D^-1/2 with add_remaining_self_loops semantics for
    unweighted graphs, scattered directly into a (pad_to, pad_to) tile-aligned buffer so
    the hot path never re-pads A."""
    size = int(num_nodes if pad_to is None else max(pad_to, num_nodes))
    src = edge_index[0]
    dst = edge_index[1]
    # TODO(synk): PyG's add_remaining_self_loops preserves existing self-loop *weights*;
    # for unweighted graphs (weight 1) replacing them with one unit loop is equivalent.
    w = jnp.where(src == dst, 0.0, 1.0).astype(jnp.float32)
    loop = jnp.arange(num_nodes, dtype=edge_index.dtype)
    src = jnp.concatenate([src, loop])
    dst = jnp.concatenate([dst, loop])
    w = jnp.concatenate([w, jnp.ones((num_nodes,), jnp.float32)])

    deg = jnp.zeros((num_nodes,), jnp.float32).at[dst].add(w)
    dinv = jnp.where(deg > 0, jax.lax.rsqrt(deg), 0.0)
    norm = dinv[src] * w * dinv[dst]

    # out[dst] += norm * x[src]  =>  A_hat[dst, src] = norm (padded rows/cols stay zero)
    a_hat = jnp.zeros((size, size), jnp.float32).at[dst, src].add(norm)
    return a_hat.astype(dtype)


# ----------------------------------------------------------------------------
# Kernels
# ----------------------------------------------------------------------------
def _gcn_fused_resident_kernel(a_ref, x_ref, w1_ref, b1_ref, w2_ref, b2_ref, o_ref):
    """Whole-array fused forward (A VMEM-resident, read once). bf16 MXU, f32 accumulate."""
    a = a_ref[...]                                                     # [N, N] bf16
    xw1 = jnp.dot(x_ref[...], w1_ref[...], preferred_element_type=jnp.float32)
    h = jnp.dot(a, xw1.astype(jnp.bfloat16), preferred_element_type=jnp.float32)
    h = jnp.tanh(h + b1_ref[...])                                      # f32 elementwise
    hw2 = jnp.dot(h.astype(jnp.bfloat16), w2_ref[...], preferred_element_type=jnp.float32)
    o_ref[...] = (jnp.dot(a, hw2.astype(jnp.bfloat16),
                          preferred_element_type=jnp.float32) + b2_ref[...])


def _z_block(z_ref, k, col_tile):
    """Current (col_tile, F) slice of Z: streamed block, or slice of the resident full Z."""
    if z_ref.shape[0] == col_tile:          # trace-time: streamed (or single-block) Z
        return z_ref[...]
    start = pl.multiple_of(k * col_tile, col_tile)
    return z_ref[pl.ds(start, col_tile), :]


def _propagate_fused_kernel(a_ref, z_ref, b_ref, wn_ref, o_ref, acc_ref, *, col_tile):
    """o_row = tanh(A_row @ Z + b) @ Wn, reduced over the k grid axis (layer 1 + fused
    layer-2 feature transform so h never round-trips HBM at full width)."""
    k = pl.program_id(1)

    @pl.when(k == 0)
    def _():
        acc_ref[...] = jnp.zeros_like(acc_ref)

    acc_ref[...] += jnp.dot(a_ref[...], _z_block(z_ref, k, col_tile),
                            preferred_element_type=jnp.float32)

    @pl.when(k == pl.num_programs(1) - 1)
    def _():
        h = jnp.tanh(acc_ref[...] + b_ref[...])                        # f32 elementwise
        o_ref[...] = jnp.dot(h.astype(jnp.bfloat16), wn_ref[...],
                             preferred_element_type=jnp.float32).astype(o_ref.dtype)


def _propagate_kernel(a_ref, z_ref, b_ref, o_ref, *, col_tile):
    """o_row = A_row @ Z + b; accumulates directly into the resident f32 output block."""
    k = pl.program_id(1)

    @pl.when(k == 0)
    def _():
        o_ref[...] = jnp.zeros_like(o_ref)

    o_ref[...] += jnp.dot(a_ref[...], _z_block(z_ref, k, col_tile),
                          preferred_element_type=jnp.float32)

    @pl.when(k == pl.num_programs(1) - 1)
    def _():
        o_ref[...] += b_ref[...]


# ----------------------------------------------------------------------------
# Wrappers
# ----------------------------------------------------------------------------
def _gcn_decoder_resident(a_hat, x, w1, b1, w2, b2, n, cfg):
    h_dim = w1.shape[1]
    f_out = w2.shape[1]
    f_out_pad = _round_up(f_out, LANE)            # lane-dense output store

    x_b = x.astype(jnp.bfloat16)
    w1_b = w1.astype(jnp.bfloat16)
    b1_r = b1.astype(jnp.float32).reshape(1, -1)
    w2_p = _pad2(w2.astype(jnp.bfloat16), h_dim, f_out_pad)
    b2_p = _pad2(b2.astype(jnp.float32).reshape(1, -1), 1, f_out_pad)

    footprint = (a_hat.size * 2 + x_b.size * 2 + w1_b.size * 2 + b1_r.size * 4
                 + w2_p.size * 2 + b2_p.size * 4
                 + n * (h_dim + 2 * f_out_pad) * 4)       # in-kernel intermediates
    vmem_limit = int(min(max(2 * footprint + (8 << 20), 16 << 20), cfg.resident_vmem_cap))

    vmem = pl.BlockSpec(memory_space=pltpu.MemorySpace.VMEM)
    out = pl.pallas_call(
        _gcn_fused_resident_kernel,
        out_shape=jax.ShapeDtypeStruct((n, f_out_pad), jnp.float32),
        in_specs=[vmem] * 6,
        out_specs=vmem,
        compiler_params=pltpu.CompilerParams(vmem_limit_bytes=vmem_limit),
    )(a_hat, x_b, w1_b, b1_r, w2_p, b2_p)
    return out[:, :f_out]


def _gcn_decoder_tiled(a_p, x, w1, b1, w2, b2, n, tile, cfg):
    np_ = a_p.shape[0]
    h_dim = w1.shape[1]
    f_out = w2.shape[1]
    h_pad = _round_up(h_dim, LANE)
    f_out_pad = _round_up(f_out, LANE)

    col_tile = tile
    row_tile = tile
    # v7x: ensure the "parallel" row axis has >= 2 blocks so it shards across both TCs.
    if cfg.multi_tc and np_ // row_tile < 2 and row_tile % 256 == 0:
        row_tile //= 2
    ni = np_ // row_tile
    nk = np_ // col_tile

    # Layer-1 feature transform is tiny; plain JAX (no extra pallas_call / HBM round trip),
    # then kept VMEM-resident below.
    xw1 = jnp.dot(x.astype(jnp.float32), w1.astype(jnp.float32))
    z1 = _pad2(xw1, np_, h_pad).astype(jnp.bfloat16)                   # [np_, 128] bf16

    b1_p = _pad2(b1.astype(jnp.float32).reshape(1, -1), 1, h_pad)
    w2_p = _pad2(w2.astype(jnp.bfloat16), h_pad, f_out_pad)
    b2_p = _pad2(b2.astype(jnp.float32).reshape(1, -1), 1, f_out_pad)

    # Keep Z (N x 128 bf16) resident in VMEM (DMA'd once) when it fits, else stream per k.
    z_resident = (2 * np_ * max(h_pad, f_out_pad) * 2) <= (cfg.tiled_vmem_limit // 2)

    def z_spec(fdim):
        if z_resident:
            return pl.BlockSpec((np_, fdim), lambda i, k: (0, 0))      # resident full Z
        return pl.BlockSpec((col_tile, fdim), lambda i, k: (k, 0))     # streamed fallback

    cp = pltpu.CompilerParams(dimension_semantics=("parallel", "arbitrary"),
                              vmem_limit_bytes=cfg.tiled_vmem_limit)
    a_spec = pl.BlockSpec((row_tile, col_tile), lambda i, k: (i, k))
    o_spec = pl.BlockSpec((row_tile, f_out_pad), lambda i, k: (i, 0))

    # Layer 1 (+ fused layer-2 feature transform): HW2 = tanh(A @ XW1 + b1) @ W2
    hw2 = pl.pallas_call(
        functools.partial(_propagate_fused_kernel, col_tile=col_tile),
        out_shape=jax.ShapeDtypeStruct((np_, f_out_pad), jnp.bfloat16),
        grid=(ni, nk),
        in_specs=[a_spec,
                  z_spec(h_pad),
                  pl.BlockSpec((1, h_pad), lambda i, k: (0, 0)),
                  pl.BlockSpec((h_pad, f_out_pad), lambda i, k: (0, 0))],
        out_specs=o_spec,
        scratch_shapes=[pltpu.VMEM((row_tile, h_pad), jnp.float32)],
        compiler_params=cp,
    )(a_p, z1, b1_p, w2_p)

    # Layer 2: out = A @ HW2 + b2 (second streamed pass over A; accumulate into f32 out).
    out = pl.pallas_call(
        functools.partial(_propagate_kernel, col_tile=col_tile),
        out_shape=jax.ShapeDtypeStruct((np_, f_out_pad), jnp.float32),
        grid=(ni, nk),
        in_specs=[a_spec,
                  z_spec(f_out_pad),
                  pl.BlockSpec((1, f_out_pad), lambda i, k: (0, 0))],
        out_specs=o_spec,
        compiler_params=cp,
    )(a_p, hw2, b2_p)

    return out[:n, :f_out]


def gcn_decoder(x, edge_index, w1, b1, w2, b2, *, a_hat=None, tile=512, force_tiled=False):
    """GCNDecoder forward.  Resident (A read once) vs tiled (streamed / megacore) path is
    chosen per TPU generation; pass a cached, pre-padded `a_hat` (GCNConv cached=True) to
    keep A_hat construction off the hot path."""
    n = x.shape[0]
    cfg = _device_config()

    if (not force_tiled) and (n * n * 2 <= cfg.resident_a_budget):
        if a_hat is None:
            a_hat = build_normalized_adjacency(edge_index, n, dtype=jnp.bfloat16)
        return _gcn_decoder_resident(a_hat.astype(jnp.bfloat16), x, w1, b1, w2, b2, n, cfg)

    tile = max(LANE, min(tile, _round_up(n, LANE)))
    np_ = _round_up(n, tile)
    if a_hat is None:
        a_p = build_normalized_adjacency(edge_index, n, pad_to=np_, dtype=jnp.bfloat16)
    else:
        a_p = a_hat.astype(jnp.bfloat16)
        np_ = _round_up(max(np_, a_p.shape[0]), tile)
        if a_p.shape[0] < np_:
            a_p = _pad2(a_p, np_, np_)   # cold path: pre-pad the cached A_hat to avoid this
    return _gcn_decoder_tiled(a_p, x, w1, b1, w2, b2, n, tile, cfg)


# ----------------------------------------------------------------------------
# Reference + demo
# ----------------------------------------------------------------------------
def reference_forward(x, edge_index, w1, b1, w2, b2):
    n = x.shape[0]
    a = build_normalized_adjacency(edge_index, n, dtype=jnp.float32)
    h = jnp.tanh(a @ (x @ w1) + b1)
    return a @ (h @ w2) + b2


def glorot(key, shape):
    fan_in, fan_out = shape
    limit = jnp.sqrt(6.0 / (fan_in + fan_out))
    return jax.random.uniform(key, shape, jnp.float32, -limit, limit)


def _make_inputs(key, num_nodes, num_edges, in_channels, out_channels):
    hidden = 2 * out_channels
    k_x, k_e, k_w1, k_w2 = jax.random.split(key, 4)
    x = jax.random.normal(k_x, (num_nodes, in_channels), dtype=jnp.float32)
    edge_index = jax.random.randint(k_e, (2, num_edges), 0, num_nodes, dtype=jnp.int32)
    w1 = glorot(k_w1, (in_channels, hidden))
    b1 = jnp.zeros((hidden,), dtype=jnp.float32)
    w2 = glorot(k_w2, (hidden, out_channels))
    b2 = jnp.zeros((out_channels,), dtype=jnp.float32)
    return x, edge_index, w1, b1, w2, b2


if __name__ == "__main__":
    key = jax.random.PRNGKey(0)
    k1, k2 = jax.random.split(key)

    # --- Test 1: module's toy shapes (GCNDecoder(8, 16), N=16) -> fused resident path.
    x, ei, w1, b1, w2, b2 = _make_inputs(k1, num_nodes=16, num_edges=32,
                                         in_channels=8, out_channels=16)
    out = gcn_decoder(x, ei, w1, b1, w2, b2)
    jax.block_until_ready(out)
    ref = reference_forward(x, ei, w1, b1, w2, b2)
    assert out.shape == (16, 16)
    assert jnp.allclose(out, ref, atol=5e-2, rtol=5e-2)

    # --- Test 2: larger, non-tile-aligned graph exercising the tiled/streamed (i, k)
    #     grid (pl.when init/accumulate, resident Z, padded A region).
    x2, ei2, w1_2, b1_2, w2_2, b2_2 = _make_inputs(k2, num_nodes=600, num_edges=3000,
                                                   in_channels=8, out_channels=16)
    out2 = gcn_decoder(x2, ei2, w1_2, b1_2, w2_2, b2_2, force_tiled=True, tile=256)
    jax.block_until_ready(out2)
    ref2 = reference_forward(x2, ei2, w1_2, b1_2, w2_2, b2_2)
    assert out2.shape == (600, 16)
    assert jnp.allclose(out2, ref2, atol=5e-2, rtol=5e-2)

    print("KERNEL_OK")
</pallas_src>

<mosaic_0001>
module attributes {stable_mosaic.version = 11 : i64} {
  func.func @_gcn_fused_resident_kernel(%arg0: memref<16x16xbf16, #tpu.memory_space<vmem>>, %arg1: memref<16x8xbf16, #tpu.memory_space<vmem>>, %arg2: memref<8x32xbf16, #tpu.memory_space<vmem>>, %arg3: memref<1x32xf32, #tpu.memory_space<vmem>>, %arg4: memref<32x128xbf16, #tpu.memory_space<vmem>>, %arg5: memref<1x128xf32, #tpu.memory_space<vmem>>, %arg6: memref<16x128xf32, #tpu.memory_space<vmem>>) attributes {dimension_semantics = [], scalar_prefetch = 0 : i64, scratch_operands = 0 : i64, tpu.core_type = #tpu.core_type<tc>} {
    %c0 = arith.constant 0 : index
    %c0_0 = arith.constant 0 : index
    %0 = vector.load %arg0[%c0, %c0_0] : memref<16x16xbf16, #tpu.memory_space<vmem>>, vector<16x16xbf16>
    %c0_1 = arith.constant 0 : index
    %c0_2 = arith.constant 0 : index
    %1 = vector.load %arg1[%c0_1, %c0_2] : memref<16x8xbf16, #tpu.memory_space<vmem>>, vector<16x8xbf16>
    %c0_3 = arith.constant 0 : index
    %c0_4 = arith.constant 0 : index
    %2 = vector.load %arg2[%c0_3, %c0_4] : memref<8x32xbf16, #tpu.memory_space<vmem>>, vector<8x32xbf16>
    %cst = arith.constant dense<0.000000e+00> : vector<16x32xf32>
    %3 = tpu.matmul %1, %2, %cst {dimension_numbers = #tpu.dot_dimension_numbers<[1], [0], [0], [1], [0, 0, 1, 1], [], []>} : vector<16x8xbf16>, vector<8x32xbf16>, vector<16x32xf32> -> vector<16x32xf32>
    %4 = arith.truncf %3 : vector<16x32xf32> to vector<16x32xbf16>
    %cst_5 = arith.constant dense<0.000000e+00> : vector<16x32xf32>
    %5 = tpu.matmul %0, %4, %cst_5 {dimension_numbers = #tpu.dot_dimension_numbers<[1], [0], [0], [1], [0, 0, 1, 1], [], []>} : vector<16x16xbf16>, vector<16x32xbf16>, vector<16x32xf32> -> vector<16x32xf32>
    %c0_6 = arith.constant 0 : index
    %c0_7 = arith.constant 0 : index
    %6 = vector.load %arg3[%c0_6, %c0_7] : memref<1x32xf32, #tpu.memory_space<vmem>>, vector<1x32xf32>
    %7 = vector.broadcast %6 : vector<1x32xf32> to vector<16x32xf32>
    %8 = arith.addf %5, %7 : vector<16x32xf32>
    %9 = math.tanh %8 : vector<16x32xf32>
    %10 = arith.truncf %9 : vector<16x32xf32> to vector<16x32xbf16>
    %c0_8 = arith.constant 0 : index
    %c0_9 = arith.constant 0 : index
    %11 = vector.load %arg4[%c0_8, %c0_9] : memref<32x128xbf16, #tpu.memory_space<vmem>>, vector<32x128xbf16>
    %cst_10 = arith.constant dense<0.000000e+00> : vector<16x128xf32>
    %12 = tpu.matmul %10, %11, %cst_10 {dimension_numbers = #tpu.dot_dimension_numbers<[1], [0], [0], [1], [0, 0, 1, 1], [], []>} : vector<16x32xbf16>, vector<32x128xbf16>, vector<16x128xf32> -> vector<16x128xf32>
    %13 = arith.truncf %12 : vector<16x128xf32> to vector<16x128xbf16>
    %cst_11 = arith.constant dense<0.000000e+00> : vector<16x128xf32>
    %14 = tpu.matmul %0, %13, %cst_11 {dimension_numbers = #tpu.dot_dimension_numbers<[1], [0], [0], [1], [0, 0, 1, 1], [], []>} : vector<16x16xbf16>, vector<16x128xbf16>, vector<16x128xf32> -> vector<16x128xf32>
    %c0_12 = arith.constant 0 : index
    %c0_13 = arith.constant 0 : index
    %15 = vector.load %arg5[%c0_12, %c0_13] : memref<1x128xf32, #tpu.memory_space<vmem>>, vector<1x128xf32>
    %16 = vector.broadcast %15 : vector<1x128xf32> to vector<16x128xf32>
    %17 = arith.addf %14, %16 : vector<16x128xf32>
    %c0_14 = arith.constant 0 : index
    %c0_15 = arith.constant 0 : index
    %18 = vector.load %arg6[%c0_14, %c0_15] : memref<16x128xf32, #tpu.memory_space<vmem>>, vector<16x128xf32>
    tpu.vector_store %arg6[%c0_14, %c0_15], %17 {strides = array<i32>} : memref<16x128xf32, #tpu.memory_space<vmem>>, vector<16x128xf32>,
    return
  }
}

</mosaic_0001>

<llo_original>
// kernel: tpu_custom_call.1
$region0: #{tpu_custom_call.1}
  #allocation0 [shape = 'u32[]', space=smem, size = 0x4, offset = 0x4, fixed_abs, tag = 'smem constant byte address 0x4 - core index']
  #allocation1 [shape = 'u32[144,128]{1,0:T(1,128)}', space=vmem, size = 0x12000, scoped, tag = 'internal scratch']
  %s0 = inlined_call_operand.vmem [shape: bf16[16,16], index: 0, kind: input, shape index: {}]
  %s1 = inlined_call_operand.vmem [shape: bf16[16,8], index: 1, kind: input, shape index: {}]
  %s2 = inlined_call_operand.hbm [shape: bf16[8,32], index: 2, kind: input, shape index: {}]
  %s3 = inlined_call_operand.vmem [shape: f32[1,32], index: 3, kind: input, shape index: {}]
  %s4 = inlined_call_operand.vmem [shape: bf16[32,128], index: 4, kind: input, shape index: {}]
  %s5 = inlined_call_operand.vmem [shape: f32[1,128], index: 5, kind: input, shape index: {}]
  %s6 = inlined_call_operand.hbm [shape: f32[16,128], index: 6, kind: output, shape index: {}]
  %s7 = sld [smem:[#allocation0]]
  $region38: #{tpu_custom_call.1} parent=0
    _
  %s9 = ssub.s32 1, %s7
  %s10 = scalar_select 0, %s9, %s7
  $region1: #{tpu_custom_call.1} parent=0
    #allocation2 [shape = 'u8[2048]{0}', space=vmem, size = 0x800, scoped, tag = 'input window, operand 2, single buffered']
    #allocation3 [shape = 's32[1]{0}', space=sflag, size = 0x4, scoped, tag = 'scoped memory for tpu_custom_call.1']
    #allocation4 [shape = 's32[1]{0}', space=sflag, size = 0x4, scoped, tag = 'scoped memory for tpu_custom_call.1']
    #allocation5 [shape = 'u8[8192]{0}', space=vmem, size = 0x2000, scoped, tag = 'output window, operand 0, single buffered']
    %11 = vsyncpa [#allocation3], 0
    %12 = vsyncpa [#allocation4], 0
    // Predicated region
    $region2: #{tpu_custom_call.1} parent=1 // pred_check
      _
    $region3: #{tpu_custom_call.1} parent=1 // pred_check_branch
      %14 = sbr.rel (0) target = $region5
    $region4: #{tpu_custom_call.1} parent=1 // pred_region
      _
    $region5: #{tpu_custom_call.1} parent=1 // pred_fallthru
      _
    // Predicated region
    $region6: #{tpu_custom_call.1} parent=1 // pred_check
      _
    $region7: #{tpu_custom_call.1} parent=1 // pred_check_branch
      %16 = sbr.rel (0) target = $region9
    $region8: #{tpu_custom_call.1} parent=1 // pred_region
      _
    $region9: #{tpu_custom_call.1} parent=1 // pred_fallthru
      _
    // Predicated region
    $region10: #{tpu_custom_call.1} parent=1 // pred_check
      _
    $region11: #{tpu_custom_call.1} parent=1 // pred_check_branch
      %18 = sbr.rel (0) target = $region13
    $region12: #{tpu_custom_call.1} parent=1 // pred_region
      %s20 = ssub.s32 64, 64
      %21 = vsyncadd [#allocation3], %s20
      %s23 = sshll.u32 [#allocation2], 4
      %s24 = int_to_ptr.vmem [resolvable:$true] %s23
      %26 = dma.hbm_to_vmem [thread:$0]  %s2, 64, %s24, [#allocation3]
    $region13: #{tpu_custom_call.1} parent=1 // pred_fallthru
      _
    // Predicated region
    $region14: #{tpu_custom_call.1} parent=1 // pred_check
      _
    $region15: #{tpu_custom_call.1} parent=1 // pred_check_branch
      %28 = sbr.rel (0) target = $region17
    $region16: #{tpu_custom_call.1} parent=1 // pred_region
      _
    $region17: #{tpu_custom_call.1} parent=1 // pred_fallthru
      _
    // Predicated region
    $region18: #{tpu_custom_call.1} parent=1 // pred_check
      _
    $region19: #{tpu_custom_call.1} parent=1 // pred_check_branch
      %30 = sbr.rel (0) target = $region21
    $region20: #{tpu_custom_call.1} parent=1 // pred_region
      _
    $region21: #{tpu_custom_call.1} parent=1 // pred_fallthru
      _
    // Predicated region
    $region22: #{tpu_custom_call.1} parent=1 // pred_check
      _
    $region23: #{tpu_custom_call.1} parent=1 // pred_check_branch
      %32 = sbr.rel (0) target = $region25
    $region24: #{tpu_custom_call.1} parent=1 // pred_region
      _
    $region25: #{tpu_custom_call.1} parent=1 // pred_fallthru
      _
    // Predicated region
    $region26: #{tpu_custom_call.1} parent=1 // pred_check
      _
    $region27: #{tpu_custom_call.1} parent=1 // pred_check_branch
      %34 = sbr.rel (0) target = $region29
    $region28: #{tpu_custom_call.1} parent=1 // pred_region
      %35 = dma.done [#allocation3], 64
    $region29: #{tpu_custom_call.1} parent=1 // pred_fallthru
      _
    %v37 = vld [vmem:[%s0] sm:$0xf]
    %v38 = vld [vmem:[%s0 + $0x4] sm:$0xf]
    %v39 = vld [vmem:[%s1] sm:$0xf]
    %v40 = vld [vmem:[%s1 + $0x4] sm:$0xf]
    %v41 = vld [vmem:[#allocation2] sm:$0xf]
    %v44 = vunpack.c.l.b16 %v39
    %v45 = vunpack.c.l.b16 %v40
    %v46 = vpack.c.b16 %v45, %v44
    %vm47 = vcmask 64512
    %v49 = vsel %vm47, %v46, 0
    %vm51 = vcmask 1043456
    %v53 = vsel %vm51, %v41, 0
    %55 = vmatprep.subr.bf16.mxu0 0
    %56 = vmatpush1.bf16.msra.mxu0 %v53
    %57 = vmatprep.subr.bf16.mxu0 0
    %58 = vmatpush1.bf16.msra.mxu0 0
    %59 = vmatprep.subr.bf16.mxu0 0
    %60 = vmatpush1.bf16.msra.mxu0 0
    %61 = vmatprep.subr.bf16.mxu0 0
    %62 = vmatpush1.bf16.msra.mxu0 0
    %63 = vmatprep.subr.bf16.mxu0 0
    %64 = vmatpush1.bf16.msra.mxu0 0
    %65 = vmatprep.subr.bf16.mxu0 0
    %66 = vmatpush1.bf16.msra.mxu0 0
    %67 = vmatprep.subr.bf16.mxu0 0
    %68 = vmatpush1.bf16.msra.mxu0 0
    %69 = vmatprep.subr.bf16.mxu0 0
    %70 = vmatpush1.bf16.msra.mxu0 0
    %71 = vmatprep.subr.bf16.mxu0 0
    %72 = vmatpush1.bf16.msra.mxu0 0
    %73 = vmatprep.subr.bf16.mxu0 0
    %74 = vmatpush1.bf16.msra.mxu0 0
    %75 = vmatprep.subr.bf16.mxu0 0
    %76 = vmatpush1.bf16.msra.mxu0 0
    %77 = vmatprep.subr.bf16.mxu0 0
    %78 = vmatpush1.bf16.msra.mxu0 0
    %79 = vmatprep.subr.bf16.mxu0 0
    %80 = vmatpush1.bf16.msra.mxu0 0
    %81 = vmatprep.subr.bf16.mxu0 0
    %82 = vmatpush1.bf16.msra.mxu0 0
    %83 = vmatprep.subr.bf16.mxu0 0
    %84 = vmatpush1.bf16.msra.mxu0 0
    %85 = vmatprep.subr.bf16.mxu0 0
    %86 = vmatpush1.bf16.msra.mxu0 0
    %87 = vmatprep.mubr.bf16.mxu0 0
    %88 = vmatmul.mubr.bf16.gmra.mrb[0].mxu0 %v49
    %v89 = vpop.f32.mrb[0].mxu0
    %v90 = vadd.f32 0.0, %v89
    %v91 = vpop.f32.mrb[0].mxu0
    %v92 = vpop.f32.mrb[0].mxu0
    %v93 = vadd.f32 0.0, %v92
    %v94 = vpop.f32.mrb[0].mxu0
    %95 = vdwg.mxu0
    %v96 = vpack.c.bf16 %v93, %v90
    %v97 = vld [vmem:[%s3] sm:$0x1]
    %v99 = vlaneseq
    %v100 = vshrl.u32 %v99, 7
    %v101 = vsub.s32 0, %v100
    %v102 = vrot.slane %v97, %v101
    %v106 = vunpack.c.l.b16 %v37
    %v107 = vunpack.c.l.b16 %v38
    %v108 = vpack.c.b16 %v107, %v106
    %vm109 = vcmask 130048
    %v111 = vsel %vm109, %v108, 0
    %113 = vmatprep.subr.bf16.mxu0 0
    %114 = vmatpush1.bf16.msra.mxu0 %v96
    %115 = vmatprep.subr.bf16.mxu0 0
    %116 = vmatpush1.bf16.msra.mxu0 0
    %117 = vmatprep.subr.bf16.mxu0 0
    %118 = vmatpush1.bf16.msra.mxu0 0
    %119 = vmatprep.subr.bf16.mxu0 0
    %120 = vmatpush1.bf16.msra.mxu0 0
    %121 = vmatprep.subr.bf16.mxu0 0
    %122 = vmatpush1.bf16.msra.mxu0 0
    %123 = vmatprep.subr.bf16.mxu0 0
    %124 = vmatpush1.bf16.msra.mxu0 0
    %125 = vmatprep.subr.bf16.mxu0 0
    %126 = vmatpush1.bf16.msra.mxu0 0
    %127 = vmatprep.subr.bf16.mxu0 0
    %128 = vmatpush1.bf16.msra.mxu0 0
    %129 = vmatprep.subr.bf16.mxu0 0
    %130 = vmatpush1.bf16.msra.mxu0 0
    %131 = vmatprep.subr.bf16.mxu0 0
    %132 = vmatpush1.bf16.msra.mxu0 0
    %133 = vmatprep.subr.bf16.mxu0 0
    %134 = vmatpush1.bf16.msra.mxu0 0
    %135 = vmatprep.subr.bf16.mxu0 0
    %136 = vmatpush1.bf16.msra.mxu0 0
    %137 = vmatprep.subr.bf16.mxu0 0
    %138 = vmatpush1.bf16.msra.mxu0 0
    %139 = vmatprep.subr.bf16.mxu0 0
    %140 = vmatpush1.bf16.msra.mxu0 0
    %141 = vmatprep.subr.bf16.mxu0 0
    %142 = vmatpush1.bf16.msra.mxu0 0
    %143 = vmatprep.subr.bf16.mxu0 0
    %144 = vmatpush1.bf16.msra.mxu0 0
    %145 = vmatprep.mubr.bf16.mxu0 0
    %146 = vmatmul.mubr.bf16.gmra.mrb[0].mxu0 %v111
    %v147 = vpop.f32.mrb[0].mxu0
    %v148 = vadd.f32 %v102, %v147
    %v149 = vpop.f32.mrb[0].mxu0
    %v150 = vpop.f32.mrb[0].mxu0
    %v151 = vadd.f32 %v102, %v150
    %v152 = vpop.f32.mrb[0].mxu0
    %153 = vdwg.mxu0
    %v154 = vtanh.pop %v148
    %v155 = vtanh.pop %v151
    %v156 = vpack.c.bf16 %v155, %v154
    %v157 = vld [vmem:[%s4] sm:$0xf]
    %v158 = vld [vmem:[%s4 + $0x4] sm:$0xf]
    %v159 = vld [vmem:[%s4 + $0x8] sm:$0xf]
    %v160 = vld [vmem:[%s4 + $0xc] sm:$0xf]
    %v165 = vunpack.c.l.b16 %v157
    %v166 = vunpack.c.l.b16 %v158
    %v167 = vunpack.c.l.b16 %v159
    %v168 = vunpack.c.l.b16 %v160
    %v169 = vpack.c.b16 %v166, %v165
    %v170 = vpack.c.b16 %v168, %v167
    %vm173 = vcmask 261120
    %v175 = vsel %vm173, %v156, 0
    %177 = vmatprep.subr.bf16.mxu0 0
    %178 = vmatpush1.bf16.msra.mxu0 %v169
    %179 = vmatprep.subr.bf16.mxu0 0
    %180 = vmatpush1.bf16.msra.mxu0 %v170
    %181 = vmatprep.subr.bf16.mxu0 0
    %182 = vmatpush1.bf16.msra.mxu0 0
    %183 = vmatprep.subr.bf16.mxu0 0
    %184 = vmatpush1.bf16.msra.mxu0 0
    %185 = vmatprep.subr.bf16.mxu0 0
    %186 = vmatpush1.bf16.msra.mxu0 0
    %187 = vmatprep.subr.bf16.mxu0 0
    %188 = vmatpush1.bf16.msra.mxu0 0
    %189 = vmatprep.subr.bf16.mxu0 0
    %190 = vmatpush1.bf16.msra.mxu0 0
    %191 = vmatprep.subr.bf16.mxu0 0
    %192 = vmatpush1.bf16.msra.mxu0 0
    %193 = vmatprep.subr.bf16.mxu0 0
    %194 = vmatpush1.bf16.msra.mxu0 0
    %195 = vmatprep.subr.bf16.mxu0 0
    %196 = vmatpush1.bf16.msra.mxu0 0
    %197 = vmatprep.subr.bf16.mxu0 0
    %198 = vmatpush1.bf16.msra.mxu0 0
    %199 = vmatprep.subr.bf16.mxu0 0
    %200 = vmatpush1.bf16.msra.mxu0 0
    %201 = vmatprep.subr.bf16.mxu0 0
    %202 = vmatpush1.bf16.msra.mxu0 0
    %203 = vmatprep.subr.bf16.mxu0 0
    %204 = vmatpush1.bf16.msra.mxu0 0
    %205 = vmatprep.subr.bf16.mxu0 0
    %206 = vmatpush1.bf16.msra.mxu0 0
    %207 = vmatprep.subr.bf16.mxu0 0
    %208 = vmatpush1.bf16.msra.mxu0 0
    %209 = vmatprep.mubr.bf16.mxu0 0
    %210 = vmatmul.mubr.bf16.gmra.mrb[0].mxu0 %v175
    %v211 = vpop.f32.mrb[0].mxu0
    %v212 = vadd.f32 0.0, %v211
    %v213 = vpop.f32.mrb[0].mxu0
    %v214 = vpop.f32.mrb[0].mxu0
    %v215 = vadd.f32 0.0, %v214
    %v216 = vpop.f32.mrb[0].mxu0
    %217 = vdwg.mxu0
    %v218 = vpack.c.bf16 %v215, %v212
    %v219 = vld [vmem:[%s5] sm:$0x1]
    %v221 = vlaneseq
    %v222 = vshrl.u32 %v221, 7
    %v223 = vsub.s32 0, %v222
    %v224 = vrot.slane %v219, %v223
    %226 = vmatprep.subr.bf16.mxu0 0
    %227 = vmatpush1.bf16.msra.mxu0 %v218
    %228 = vmatprep.subr.bf16.mxu0 0
    %229 = vmatpush1.bf16.msra.mxu0 0
    %230 = vmatprep.subr.bf16.mxu0 0
    %231 = vmatpush1.bf16.msra.mxu0 0
    %232 = vmatprep.subr.bf16.mxu0 0
    %233 = vmatpush1.bf16.msra.mxu0 0
    %234 = vmatprep.subr.bf16.mxu0 0
    %235 = vmatpush1.bf16.msra.mxu0 0
    %236 = vmatprep.subr.bf16.mxu0 0
    %237 = vmatpush1.bf16.msra.mxu0 0
    %238 = vmatprep.subr.bf16.mxu0 0
    %239 = vmatpush1.bf16.msra.mxu0 0
    %240 = vmatprep.subr.bf16.mxu0 0
    %241 = vmatpush1.bf16.msra.mxu0 0
    %242 = vmatprep.subr.bf16.mxu0 0
    %243 = vmatpush1.bf16.msra.mxu0 0
    %244 = vmatprep.subr.bf16.mxu0 0
    %245 = vmatpush1.bf16.msra.mxu0 0
    %246 = vmatprep.subr.bf16.mxu0 0
    %247 = vmatpush1.bf16.msra.mxu0 0
    %248 = vmatprep.subr.bf16.mxu0 0
    %249 = vmatpush1.bf16.msra.mxu0 0
    %250 = vmatprep.subr.bf16.mxu0 0
    %251 = vmatpush1.bf16.msra.mxu0 0
    %252 = vmatprep.subr.bf16.mxu0 0
    %253 = vmatpush1.bf16.msra.mxu0 0
    %254 = vmatprep.subr.bf16.mxu0 0
    %255 = vmatpush1.bf16.msra.mxu0 0
    %256 = vmatprep.subr.bf16.mxu0 0
    %257 = vmatpush1.bf16.msra.mxu0 0
    %258 = vmatprep.mubr.bf16.mxu0 0
    %259 = vmatmul.mubr.bf16.gmra.mrb[0].mxu0 %v111
    %v260 = vpop.f32.mrb[0].mxu0
    %v261 = vadd.f32 %v224, %v260
    %v262 = vpop.f32.mrb[0].mxu0
    %v263 = vpop.f32.mrb[0].mxu0
    %v264 = vadd.f32 %v224, %v263
    %v265 = vpop.f32.mrb[0].mxu0
    %266 = vdwg.mxu0
    %267 = vst [vmem:[#allocation5] sm:$0xff] %v261
    %268 = vst [vmem:[#allocation5 + $0x8] sm:$0xff] %v264
    // Predicated region
    $region30: #{tpu_custom_call.1} parent=1 // pred_check
      _
    $region31: #{tpu_custom_call.1} parent=1 // pred_check_branch
      %270 = sbr.rel (0) target = $region33
    $region32: #{tpu_custom_call.1} parent=1 // pred_region
      %s272 = ssub.s32 256, 256
      %273 = vsyncadd [#allocation4], %s272
      %s274 = sshll.u32 [#allocation5], 4
      %s275 = int_to_ptr.vmem [resolvable:$true] %s274
      %280 = dma.vmem_to_hbm [thread:$0]  %s275, 256, %s6, [#allocation4], 128, 128, 8
    $region33: #{tpu_custom_call.1} parent=1 // pred_fallthru
      _
    // Predicated region
    $region34: #{tpu_custom_call.1} parent=1 // pred_check
      _
    $region35: #{tpu_custom_call.1} parent=1 // pred_check_branch
      %282 = sbr.rel (0) target = $region37
    $region36: #{tpu_custom_call.1} parent=1 // pred_region
      %283 = dma.done [#allocation4], 256
    $region37: #{tpu_custom_call.1} parent=1 // pred_fallthru
      _
    %284 = vsyncpa [#allocation3], 1
    %285 = vsyncpa [#allocation4], 1

</llo_original>
